<compile_context>
chip_gen: v7x
topology: tpu7x:2x2x1
jax: 0.10.0
libtpu: 0.0.40
codegen_flags: <defaults>
</compile_context>

<pallas_src>
import functools
from types import SimpleNamespace

import jax
import jax.numpy as jnp
from jax.experimental import pallas as pl
from jax.experimental.pallas import tpu as pltpu


def _round_up(a, b):
    return (a + b - 1) // b * b


_DEVICE_KIND = ""
try:
    _DEVICE_KIND = jax.devices()[0].device_kind.lower()
except Exception:  # pragma: no cover - device query should not break tracing
    pass
_IS_V6 = "v6" in _DEVICE_KIND
_NUM_TC = 2 if "v7" in _DEVICE_KIND else 1


# ----------------------------------------------------------------------------
# Kernel 1: tiled matmul + bias.  bf16 operands, f32 VMEM accumulator, reduction axis last.
# Used for every 1x1 convolution (scale == 1 there, so bias only).
# ----------------------------------------------------------------------------

def _matmul_bias_kernel(x_ref, w_ref, b_ref, o_ref, acc_ref, *, relu):
    @pl.when(pl.program_id(2) == 0)
    def _():
        acc_ref[...] = jnp.zeros_like(acc_ref)

    acc_ref[...] += jnp.dot(x_ref[...], w_ref[...],
                            preferred_element_type=jnp.float32)

    @pl.when(pl.program_id(2) == pl.num_programs(2) - 1)
    def _():
        res = acc_ref[...] + b_ref[...]
        if relu:
            res = jnp.maximum(res, 0.0)
        o_ref[...] = res.astype(o_ref.dtype)


def matmul_bias(x2d, w, bias=None, relu=False, out_dtype=jnp.float32):
    """x2d: (M, K), w: (K, N), bias: (N,) -> (M, N).  MXU runs in bf16, accumulates f32."""
    M, K = x2d.shape
    N = w.shape[1]
    # v6e (128 MiB VMEM) amortizes per-step overhead with bigger blocks; keep 256/512 elsewhere.
    tm_cap, tn_cap, tk_cap = (512, 512, 1024) if _IS_V6 else (256, 256, 512)
    tm = min(tm_cap, _round_up(M, 8))
    tn = min(tn_cap, _round_up(N, 128))
    tk = min(tk_cap, _round_up(K, 128))
    if _NUM_TC > 1 and _round_up(M, tm) // tm < 2 and M >= 16:
        # v7x has 2 TensorCores: make sure the parallel M axis has >=2 tiles of work.
        tm = _round_up(-(-M // 2), 8)
    Mp, Np, Kp = _round_up(M, tm), _round_up(N, tn), _round_up(K, tk)
    xp = jnp.pad(x2d.astype(jnp.bfloat16), ((0, Mp - M), (0, Kp - K)))
    wp = jnp.pad(w.astype(jnp.bfloat16), ((0, Kp - K), (0, Np - N)))
    b = jnp.zeros((N,), jnp.float32) if bias is None else bias.astype(jnp.float32)
    bp = jnp.pad(b.reshape(1, N), ((0, 0), (0, Np - N)))
    grid = (Mp // tm, Np // tn, Kp // tk)
    out = pl.pallas_call(
        functools.partial(_matmul_bias_kernel, relu=relu),
        out_shape=jax.ShapeDtypeStruct((Mp, Np), out_dtype),
        grid=grid,
        in_specs=[
            pl.BlockSpec((tm, tk), lambda i, j, k: (i, k)),
            pl.BlockSpec((tk, tn), lambda i, j, k: (k, j)),
            pl.BlockSpec((1, tn), lambda i, j, k: (0, j)),
        ],
        out_specs=pl.BlockSpec((tm, tn), lambda i, j, k: (i, j)),
        scratch_shapes=[pltpu.VMEM((tm, tn), jnp.float32)],
        compiler_params=pltpu.CompilerParams(
            dimension_semantics=("parallel", "parallel", "arbitrary")),
    )(xp, wp, bp)
    return out[:M, :N]


def conv1x1_apply(x_nhwc, w_kn, bias=None, out_dtype=jnp.float32):
    B, H, W, Cin = x_nhwc.shape
    Cout = w_kn.shape[1]
    out = matmul_bias(x_nhwc.reshape(B * H * W, Cin), w_kn, bias, out_dtype=out_dtype)
    return out.reshape(B, H, W, Cout)


# ----------------------------------------------------------------------------
# Kernel 2: direct 3x3 conv (stride 1, pad 1) fused with BatchNorm(eval) + ReLU.
# The 3 dx column views are channel-concatenated in the wrapper, so the kernel does 3 wide
# MXU dots (K = 3*Cin) accumulating into an f32 VMEM scratch; weights are resident across
# the whole grid; W is padded to a multiple of 8 so dy*Wp8 row offsets are sublane-aligned.
# ----------------------------------------------------------------------------

def _conv3x3_bn_relu_kernel(x_ref, w_ref, s_ref, b_ref, o_ref, acc_ref, *, H, Wp8):
    HW = H * Wp8
    acc_ref[...] = jnp.dot(x_ref[0, 0:HW, :], w_ref[0],
                           preferred_element_type=jnp.float32)
    for dy in (1, 2):
        # row offsets dy*Wp8 are multiples of 8 -> aligned sublane slices, no relayouts
        acc_ref[...] += jnp.dot(x_ref[0, dy * Wp8:dy * Wp8 + HW, :], w_ref[dy],
                                preferred_element_type=jnp.float32)
    o_ref[0] = jnp.maximum(acc_ref[...] * s_ref[...] + b_ref[...], 0.0).astype(o_ref.dtype)


def conv3x3_bn_relu_apply(x_nhwc, w_oihw, bn, eps=1e-5, out_dtype=jnp.bfloat16):
    """Conv2d(3x3, stride 1, pad 1, no bias) + BatchNorm(eval) + ReLU, fully fused."""
    gamma, beta, mean, var = bn
    B, H, W, Cin = x_nhwc.shape
    Cout = w_oihw.shape[0]
    Wp8 = _round_up(W, 8)
    inv = jax.lax.rsqrt(var.astype(jnp.float32) + eps)
    scale = (gamma * inv).astype(jnp.float32).reshape(1, Cout)
    shift = (beta - mean * gamma * inv).astype(jnp.float32).reshape(1, Cout)

    # conv halo (1) + pad width up to a multiple of 8; extra columns are discarded below.
    xpad = jnp.pad(x_nhwc.astype(jnp.bfloat16),
                   ((0, 0), (1, 1), (1, 1 + Wp8 - W), (0, 0)))
    # Three column-shifted flattened views, channel-concatenated: (B, (H+2)*Wp8, 3*Cin).
    xcols = jnp.concatenate(
        [xpad[:, :, dx:dx + Wp8, :].reshape(B, (H + 2) * Wp8, Cin) for dx in range(3)],
        axis=-1)
    # Weights as (dy, dx*Cin + ci, Cout) to match the channel-concat order above.
    w3 = jnp.transpose(w_oihw, (2, 3, 1, 0)).reshape(3, 3 * Cin, Cout).astype(jnp.bfloat16)

    # TODO(synk): at production H,W add a row-strip grid axis (1-row halo via pl.Element)
    # so the activation block and f32 accumulator stay within v7x's 64 MiB VMEM.
    out = pl.pallas_call(
        functools.partial(_conv3x3_bn_relu_kernel, H=H, Wp8=Wp8),
        out_shape=jax.ShapeDtypeStruct((B, H * Wp8, Cout), out_dtype),
        grid=(B,),
        in_specs=[
            pl.BlockSpec((1, (H + 2) * Wp8, 3 * Cin), lambda b: (b, 0, 0)),
            pl.BlockSpec((3, 3 * Cin, Cout), lambda b: (0, 0, 0)),   # resident weights: 1 DMA
            pl.BlockSpec((1, Cout), lambda b: (0, 0)),
            pl.BlockSpec((1, Cout), lambda b: (0, 0)),
        ],
        out_specs=pl.BlockSpec((1, H * Wp8, Cout), lambda b: (b, 0, 0)),
        scratch_shapes=[pltpu.VMEM((H * Wp8, Cout), jnp.float32)],
        compiler_params=pltpu.CompilerParams(
            dimension_semantics=("parallel",),
            vmem_limit_bytes=48 * 1024 * 1024),
    )(xcols, w3, scale, shift)
    return out.reshape(B, H, Wp8, Cout)[:, :, :W, :]


# ----------------------------------------------------------------------------
# Kernel 3: fused local_pairwise_map + warp-feature aggregation for ALL max_distances.
# The kx shifts are precomputed as K column-shifted flattened views (aligned in-kernel ky*Wp8
# offsets, no relayouts).  y^2 is computed in-kernel (the reference's 1e20 pad border only
# zeroes weights whose `other` window is already zero, so it is not needed).  The per-tap
# weights of the distances sharing a tap are combined before the single multiply-add with
# the `other` window.  Elementwise math stays f32 (v5e VPU has no bf16 ALU).
# ----------------------------------------------------------------------------

def _pick_strip_rows(H, Wp8, C):
    # keep roughly <= 2 MiB of f32 per (hs*Wp8, C) slab; strips must divide H
    budget_rows = max(8, (2 << 20) // max(1, Wp8 * C * 4))
    for cand in range(min(H, budget_rows), 0, -1):
        if H % cand == 0:
            return cand
    return H


def _warp_fused_kernel(xcat_ref, ycols_ref, ocols_ref, o_ref,
                       *, hs, Wp8, C, D, dists, n_strips):
    nd = len(dists)
    K = 2 * D + 1
    HW = hs * Wp8
    if n_strips > 1:
        base = pl.multiple_of(pl.program_id(1) * HW, 8)
    else:
        base = 0

    xs_l = [xcat_ref[0, :, i * C:(i + 1) * C].astype(jnp.float32) for i in range(nd)]
    # squared norms of the ORIGINAL (un-scrambled) center features == xs_l[0]
    x2 = jnp.sum(xs_l[0] * xs_l[0], axis=-1, keepdims=True)
    inv = [1.0 / (nd * (2 * d + 1) ** 2) for d in dists]   # folds per-distance mean + /nd

    acc = jnp.zeros((HW, C), jnp.float32)
    for ky in range(K):
        for kx in range(K):
            active = [di for di, d in enumerate(dists)
                      if abs(ky - D) <= d and abs(kx - D) <= d]
            if not active:
                continue
            start = base + ky * Wp8                      # multiple of 8 (Wp8 % 8 == 0)
            if n_strips > 1:
                start = pl.multiple_of(start, 8)
            ys = ycols_ref[0, kx, pl.ds(start, HW), :].astype(jnp.float32)
            y2 = jnp.sum(ys * ys, axis=-1, keepdims=True)
            wsum = None
            for di in active:
                xy = jnp.sum(xs_l[di] * ys, axis=-1, keepdims=True)
                dist = jnp.minimum(x2 + y2 - 2.0 * xy, 80.0)
                # 1 - (sigmoid(dist)-0.5)*2 == 2*sigmoid(-dist); exp + approx reciprocal
                # both land on the EUP slot, keeping the VALU free.
                wgt = 2.0 * pl.reciprocal(1.0 + jnp.exp(dist), approx=True)
                c = wgt * inv[di]
                wsum = c if wsum is None else wsum + c
            os_ = ocols_ref[0, kx, pl.ds(start, HW), :].astype(jnp.float32)
            acc = acc + os_ * wsum
    o_ref[0] = acc.astype(o_ref.dtype)


def warp_aggregate_fused(x_list, y_nhwc, other_nhwc, max_distances,
                         out_dtype=jnp.bfloat16):
    """Returns mean over max_distances of the warp features, (B, H, W, C)."""
    B, H, W, C = y_nhwc.shape
    nd = len(x_list)
    D = max(max_distances)
    K = 2 * D + 1
    Wp8 = _round_up(W, 8)
    Hp2 = H + 2 * D

    # zero-pad: D rows/cols of window halo + width up to a multiple of 8
    pad = ((0, 0), (D, D), (D, D + Wp8 - W), (0, 0))
    ypad = jnp.pad(y_nhwc.astype(jnp.bfloat16), pad)
    opad = jnp.pad(other_nhwc.astype(jnp.bfloat16), pad)
    # K column-shifted flattened views stacked on a tap axis; kx shifts are done here so the
    # in-kernel ky shifts become aligned ky*Wp8 sublane offsets -> no relayout copies.
    # TODO(synk): at very large H,W replace the K-view slabs with a single resident slab +
    # one pltpu.roll per kx to cut the K-fold HBM/VMEM footprint.
    ycols = jnp.stack([ypad[:, :, kx:kx + Wp8, :].reshape(B, Hp2 * Wp8, C)
                       for kx in range(K)], axis=1)
    ocols = jnp.stack([opad[:, :, kx:kx + Wp8, :].reshape(B, Hp2 * Wp8, C)
                       for kx in range(K)], axis=1)
    xcat = jnp.concatenate(
        [jnp.pad(x.astype(jnp.bfloat16), ((0, 0), (0, 0), (0, Wp8 - W), (0, 0)))
         .reshape(B, H * Wp8, C) for x in x_list], axis=-1)

    hs = _pick_strip_rows(H, Wp8, C)
    n_strips = H // hs

    kernel = functools.partial(_warp_fused_kernel, hs=hs, Wp8=Wp8, C=C, D=D,
                               dists=tuple(max_distances), n_strips=n_strips)
    out = pl.pallas_call(
        kernel,
        out_shape=jax.ShapeDtypeStruct((B, H * Wp8, C), out_dtype),
        grid=(B, n_strips),
        in_specs=[
            pl.BlockSpec((1, hs * Wp8, nd * C), lambda b, s: (b, s, 0)),
            # padded slabs stay resident per batch (block index constant along the strip axis)
            pl.BlockSpec((1, K, Hp2 * Wp8, C), lambda b, s: (b, 0, 0, 0)),
            pl.BlockSpec((1, K, Hp2 * Wp8, C), lambda b, s: (b, 0, 0, 0)),
        ],
        out_specs=pl.BlockSpec((1, hs * Wp8, C), lambda b, s: (b, s, 0)),
        compiler_params=pltpu.CompilerParams(
            dimension_semantics=("parallel", "parallel"),
            vmem_limit_bytes=48 * 1024 * 1024),
    )(xcat, ycols, ocols)
    return out.reshape(B, H, Wp8, C)[:, :, :W, :]


# ----------------------------------------------------------------------------
# Kernel 4: softmax over the class dimension, lane-dense layout:
# classes (8) on the sublane axis, pixels on the 128-lane axis.
# ----------------------------------------------------------------------------

def _softmax_cols_kernel(x_ref, o_ref):
    x = x_ref[...]
    m = jnp.max(x, axis=0, keepdims=True)
    e = jnp.exp(x - m)
    o_ref[...] = e / jnp.sum(e, axis=0, keepdims=True)


def softmax_over_classes(x2d):
    """x2d: (P, nc) -> softmax over nc."""
    P, nc = x2d.shape
    xt = jnp.transpose(x2d.astype(jnp.float32))          # (nc, P): pixels on lanes
    pt = min(2048, _round_up(P, 128))
    Pp = _round_up(P, pt)
    xp = jnp.pad(xt, ((0, 0), (0, Pp - P)))
    out = pl.pallas_call(
        _softmax_cols_kernel,
        out_shape=jax.ShapeDtypeStruct((nc, Pp), jnp.float32),
        grid=(Pp // pt,),
        in_specs=[pl.BlockSpec((nc, pt), lambda i: (0, i))],
        out_specs=pl.BlockSpec((nc, pt), lambda i: (0, i)),
        compiler_params=pltpu.CompilerParams(dimension_semantics=("parallel",)),
    )(xp)
    return jnp.transpose(out[:, :P])


# ----------------------------------------------------------------------------
# WarpNetMerge / OurWarpMerge forward (inference path)
# ----------------------------------------------------------------------------

def warp_net_merge_forward(clip_embs, conv4, clip_num, params, args):
    """clip_embs: (F, h, w, 512), conv4: (F, h, w, 1024) -> ([pred], clip_emb2, deepsup)."""
    clip_emb2 = conv3x3_bn_relu_apply(clip_embs, params['emb_w'], params['emb_bn'])
    conv4_emb = conv3x3_bn_relu_apply(conv4, params['emb2_w'], params['emb2_bn'])
    per = clip_emb2.shape[0] // clip_num
    c_img = clip_emb2[-per:]
    other_clips = [clip_emb2[i * per:(i + 1) * per] for i in range(clip_num - 1)]
    c_conv4 = conv4_emb[-per:]
    other_conv4 = [conv4_emb[i * per:(i + 1) * per] for i in range(clip_num - 1)]
    B, h, w, C = c_img.shape

    # Dropout2d is identity in eval mode.
    deepsup = conv1x1_apply(conv4_emb, params['prop_last_w'], params['prop_last_b'])

    # Reference quirks reproduced faithfully:
    #  * the dist maps actually used come from the LAST other_conv4 clip (the loop variable
    #    `dist_maps` shadows the per-clip results in the reference),
    #  * only the FIRST other clip produces a prediction (early `return` inside the loop),
    #  * for max_distances[1:] the reference's `.contiguous().view().permute()` chain
    #    re-interprets (scrambles) the center features x, while x2 stays the squared norm
    #    of the ORIGINAL features — intentional, do not "fix".
    y_conv4 = other_conv4[-1]
    other = other_clips[0]
    x_cur = c_conv4.reshape(B, h * w, C)
    x_list = []
    for idx, _d in enumerate(args.max_distances):
        if idx > 0:
            x_cur = x_cur.reshape(B, h * w * C).reshape(B, C, h * w).transpose(0, 2, 1)
        x_list.append(x_cur.reshape(B, h, w, C))
    # Fused over all max_distances; already returns the mean (== cat(...,-1).mean(-1)).
    warp_fs = warp_aggregate_fused(x_list, y_conv4, other, args.max_distances)

    # TODO(synk): distsoftmax / distnearest branches are not implemented
    # (the synthetic args select the default sigmoid-weighting branch).
    final_fea = jnp.concatenate([c_img, warp_fs.astype(c_img.dtype)], axis=-1)
    pred = conv1x1_apply(final_fea, params['last2_w'], params['last2_b'])
    return [pred], clip_emb2, deepsup


def encoder_stub(x_nchw, params):
    # TODO(synk): the real `net_enc` (ResNet backbone) is an injected module; replaced by a
    # deterministic stub: 4x4 average pool + 1x1 projections (projections run in Pallas).
    x = jnp.transpose(x_nchw, (0, 2, 3, 1))                           # NHWC
    B, H, W, C = x.shape
    pooled = x.reshape(B, H // 4, 4, W // 4, 4, C).mean(axis=(2, 4))  # (B, h, w, 3)
    pooled = jnp.pad(pooled, ((0, 0), (0, 0), (0, 0), (0, 8 - C)))    # pad channels to 8
    feat4 = conv1x1_apply(pooled, params['enc4_w'], out_dtype=jnp.bfloat16)
    feat5 = conv1x1_apply(pooled, params['enc5_w'], out_dtype=jnp.bfloat16)
    return [feat4, feat5]


def decoder_stub(feats, params):
    # TODO(synk): the real `net_dec` is an injected module; stubbed with a Pallas 1x1 conv.
    return conv1x1_apply(feats[-1], params['dec_w'], out_dtype=jnp.bfloat16)


def _bilinear_matrix(out_size, in_size):
    """Interpolation matrix matching F.interpolate(mode='bilinear', align_corners=False)."""
    scale = in_size / out_size
    dst = jnp.arange(out_size, dtype=jnp.float32)
    src = jnp.maximum((dst + 0.5) * scale - 0.5, 0.0)
    x0 = jnp.minimum(jnp.floor(src).astype(jnp.int32), in_size - 1)
    x1 = jnp.minimum(x0 + 1, in_size - 1)
    lam = src - x0.astype(jnp.float32)
    return (jax.nn.one_hot(x0, in_size) * (1.0 - lam)[:, None]
            + jax.nn.one_hot(x1, in_size) * lam[:, None])


def our_warp_merge_forward(feed_dict, segSize, params, args):
    """Inference path of OurWarpMerge.forward (segSize is not None)."""
    # TODO(synk): the training branch (segSize is None) needs the injected `crit` loss
    # module and labels; only the inference branch is implemented.
    c_img = feed_dict['img_data']
    clip_imgs = list(feed_dict['clipimgs_data'])
    clip_num = len(clip_imgs)
    clip_imgs.append(c_img)
    inp = jnp.concatenate(clip_imgs, axis=0)                          # (F, 3, Hi, Wi) NCHW

    clip_tmp = encoder_stub(inp, params)
    clip_embs = decoder_stub(clip_tmp, params)
    pred_cs, embs_, _pred_deepsup = warp_net_merge_forward(
        clip_embs, clip_tmp[-2], clip_num + 1, params, args)

    pred_s = conv1x1_apply(embs_, params['main_last_w'], params['main_last_b'])
    per = pred_s.shape[0] // (clip_num + 1)
    pred_cc = pred_s[-per:]                                           # center frame

    final = jnp.mean(jnp.stack([pred_cc] + pred_cs, axis=0), axis=0)  # (1, h, w, nc)
    Wy = _bilinear_matrix(segSize[0], final.shape[1])
    Wx = _bilinear_matrix(segSize[1], final.shape[2])
    resized = jnp.einsum('Hh,nhwc,Ww->nHWc', Wy, final, Wx)           # glue: bilinear upsample
    n, Ho, Wo, nc = resized.shape
    probs = softmax_over_classes(resized.reshape(n * Ho * Wo, nc)).reshape(n, Ho, Wo, nc)
    return jnp.transpose(probs, (0, 3, 1, 2))                         # NCHW, like the reference


# ----------------------------------------------------------------------------
# Deterministic parameter initialization (synthetic; shapes follow the module)
# ----------------------------------------------------------------------------

def init_params(key, num_class, emb_dim=256):
    ks = jax.random.split(key, 13)
    nrm = lambda k, shp, s: s * jax.random.normal(k, shp, jnp.float32)

    def bn(k, c):
        k1, k2, k3, k4 = jax.random.split(k, 4)
        gamma = 1.0 + nrm(k1, (c,), 0.1)
        beta = nrm(k2, (c,), 0.1)
        mean = nrm(k3, (c,), 0.1)
        var = 1.0 + 0.2 * jnp.abs(jax.random.normal(k4, (c,), jnp.float32))
        return (gamma, beta, mean, var)

    return {
        'enc4_w': nrm(ks[0], (8, 1024), 0.1),                 # encoder stub 1x1 conv
        'enc5_w': nrm(ks[1], (8, 2048), 0.1),                 # encoder stub 1x1 conv
        'dec_w': nrm(ks[2], (2048, 512), 0.02),               # decoder stub 1x1 conv
        'emb_w': nrm(ks[3], (emb_dim, 512, 3, 3), 0.02),      # Conv2d(512, 256, 3) OIHW
        'emb_bn': bn(ks[4], emb_dim),
        'emb2_w': nrm(ks[5], (emb_dim, 1024, 3, 3), 0.015),   # Conv2d(1024, 256, 3) OIHW
        'emb2_bn': bn(ks[6], emb_dim),
        'prop_last_w': nrm(ks[7], (emb_dim, num_class), 0.05),    # WarpNetMerge.last_layer
        'prop_last_b': nrm(ks[8], (num_class,), 0.01),
        'last2_w': nrm(ks[9], (2 * emb_dim, num_class), 0.05),    # WarpNetMerge.last_layer2
        'last2_b': nrm(ks[10], (num_class,), 0.01),
        'main_last_w': nrm(ks[11], (emb_dim, num_class), 0.05),   # OurWarpMerge.last_layer
        'main_last_b': nrm(ks[12], (num_class,), 0.01),
    }


if __name__ == "__main__":
    key = jax.random.PRNGKey(0)
    kp, k1, k2, k3 = jax.random.split(key, 4)

    args = SimpleNamespace(num_class=8, max_distances=[1, 2],
                           distsoftmax=False, distnearest=False, temp=1.0)
    params = init_params(kp, args.num_class)

    # feed_dict mirrors the PyTorch module's expectations (NCHW image tensors).
    c_img = jax.random.normal(k1, (1, 3, 32, 32), jnp.float32)
    clip_imgs = [jax.random.normal(k2, (1, 3, 32, 32), jnp.float32),
                 jax.random.normal(k3, (1, 3, 32, 32), jnp.float32)]
    feed_dict = {
        'img_data': c_img,
        'clipimgs_data': clip_imgs,
        'seg_label': jnp.zeros((1, 1, 32, 32), jnp.int32),   # unused on the inference path
    }

    out = our_warp_merge_forward(feed_dict, segSize=(32, 32), params=params, args=args)
    out = jax.block_until_ready(out)

    assert out.shape == (1, args.num_class, 32, 32), out.shape
    assert bool(jnp.all(jnp.isfinite(out)))
    assert bool(jnp.allclose(out.sum(axis=1), 1.0, atol=1e-3))
    print("KERNEL_OK")
</pallas_src>

<mosaic_0001>
module attributes {stable_mosaic.version = 11 : i64} {
  func.func @_matmul_bias_kernel(%arg0: i32, %arg1: i32, %arg2: i32, %arg3: memref<192x128xbf16, #tpu.memory_space<vmem>>, %arg4: memref<128x256xbf16, #tpu.memory_space<vmem>>, %arg5: memref<1x256xf32, #tpu.memory_space<vmem>>, %arg6: memref<192x256xbf16, #tpu.memory_space<vmem>>, %arg7: memref<192x256xf32, #tpu.memory_space<vmem>>) attributes {dimension_semantics = [#tpu.dimension_semantics<parallel>, #tpu.dimension_semantics<parallel>, #tpu.dimension_semantics<arbitrary>], iteration_bounds = array<i64: 1, 4, 1>, scalar_prefetch = 0 : i64, scratch_operands = 1 : i64, tpu.core_type = #tpu.core_type<tc>, window_params = [{transform_indices = @transform_0, window_bounds = array<i64: 192, 128>}, {transform_indices = @transform_1, window_bounds = array<i64: 128, 256>}, {transform_indices = @transform_2, window_bounds = array<i64: 1, 256>}, {transform_indices = @transform_3, window_bounds = array<i64: 192, 256>}]} {
    %c0_i32 = arith.constant 0 : i32
    %0 = arith.cmpi eq, %arg2, %c0_i32 : i32
    %1 = arith.extui %0 : i1 to i32
    %c0_i32_0 = arith.constant 0 : i32
    %2 = arith.cmpi ne, %1, %c0_i32_0 : i32
    scf.if %2 {
      %cst_10 = arith.constant 0.000000e+00 : f32
      %12 = vector.broadcast %cst_10 : f32 to vector<192x256xf32>
      %c0_11 = arith.constant 0 : index
      %c0_12 = arith.constant 0 : index
      %13 = vector.load %arg7[%c0_11, %c0_12] : memref<192x256xf32, #tpu.memory_space<vmem>>, vector<192x256xf32>
      tpu.vector_store %arg7[%c0_11, %c0_12], %12 {strides = array<i32>} : memref<192x256xf32, #tpu.memory_space<vmem>>, vector<192x256xf32>,
    } else {
    }
    %c0 = arith.constant 0 : index
    %c0_1 = arith.constant 0 : index
    %3 = vector.load %arg7[%c0, %c0_1] : memref<192x256xf32, #tpu.memory_space<vmem>>, vector<192x256xf32>
    %c0_2 = arith.constant 0 : index
    %c0_3 = arith.constant 0 : index
    %4 = vector.load %arg3[%c0_2, %c0_3] : memref<192x128xbf16, #tpu.memory_space<vmem>>, vector<192x128xbf16>
    %c0_4 = arith.constant 0 : index
    %c0_5 = arith.constant 0 : index
    %5 = vector.load %arg4[%c0_4, %c0_5] : memref<128x256xbf16, #tpu.memory_space<vmem>>, vector<128x256xbf16>
    %cst = arith.constant dense<0.000000e+00> : vector<192x256xf32>
    %6 = tpu.matmul %4, %5, %cst {dimension_numbers = #tpu.dot_dimension_numbers<[1], [0], [0], [1], [0, 0, 1, 1], [], []>} : vector<192x128xbf16>, vector<128x256xbf16>, vector<192x256xf32> -> vector<192x256xf32>
    %7 = arith.addf %3, %6 : vector<192x256xf32>
    %c0_6 = arith.constant 0 : index
    %c0_7 = arith.constant 0 : index
    %8 = vector.load %arg7[%c0_6, %c0_7] : memref<192x256xf32, #tpu.memory_space<vmem>>, vector<192x256xf32>
    tpu.vector_store %arg7[%c0_6, %c0_7], %7 {strides = array<i32>} : memref<192x256xf32, #tpu.memory_space<vmem>>, vector<192x256xf32>,
    %c0_i32_8 = arith.constant 0 : i32
    %9 = arith.cmpi eq, %arg2, %c0_i32_8 : i32
    %10 = arith.extui %9 : i1 to i32
    %c0_i32_9 = arith.constant 0 : i32
    %11 = arith.cmpi ne, %10, %c0_i32_9 : i32
    scf.if %11 {
      %c0_10 = arith.constant 0 : index
      %c0_11 = arith.constant 0 : index
      %12 = vector.load %arg7[%c0_10, %c0_11] : memref<192x256xf32, #tpu.memory_space<vmem>>, vector<192x256xf32>
      %c0_12 = arith.constant 0 : index
      %c0_13 = arith.constant 0 : index
      %13 = vector.load %arg5[%c0_12, %c0_13] : memref<1x256xf32, #tpu.memory_space<vmem>>, vector<1x256xf32>
      %14 = vector.broadcast %13 : vector<1x256xf32> to vector<192x256xf32>
      %15 = arith.addf %12, %14 : vector<192x256xf32>
      %16 = arith.truncf %15 : vector<192x256xf32> to vector<192x256xbf16>
      %c0_14 = arith.constant 0 : index
      %c0_15 = arith.constant 0 : index
      %17 = vector.load %arg6[%c0_14, %c0_15] : memref<192x256xbf16, #tpu.memory_space<vmem>>, vector<192x256xbf16>
      tpu.vector_store %arg6[%c0_14, %c0_15], %16 {strides = array<i32>} : memref<192x256xbf16, #tpu.memory_space<vmem>>, vector<192x256xbf16>,
    } else {
    }
    return
  }
  func.func @transform_0(%arg0: i32, %arg1: i32, %arg2: i32) -> (i32, i32) {
    %c0_i32 = arith.constant 0 : i32
    return %arg0, %arg2 : i32, i32
  }
  func.func @transform_1(%arg0: i32, %arg1: i32, %arg2: i32) -> (i32, i32) {
    %c0_i32 = arith.constant 0 : i32
    return %arg2, %arg1 : i32, i32
  }
  func.func @transform_2(%arg0: i32, %arg1: i32, %arg2: i32) -> (i32, i32) {
    %c0_i32 = arith.constant 0 : i32
    %c0_i32_0 = arith.constant 0 : i32
    return %c0_i32, %arg1 : i32, i32
  }
  func.func @transform_3(%arg0: i32, %arg1: i32, %arg2: i32) -> (i32, i32) {
    %c0_i32 = arith.constant 0 : i32
    return %arg0, %arg1 : i32, i32
  }
}

</mosaic_0001>

<llo_original>
// kernel: tpu_custom_call.1
$region0: #{tpu_custom_call.1}
  #allocation0 [shape = 'u32[]', space=smem, size = 0x4, offset = 0x4, fixed_abs, tag = 'smem constant byte address 0x4 - core index']
  #allocation1 [shape = 'u32[144,128]{1,0:T(1,128)}', space=vmem, size = 0x12000, scoped, tag = 'internal scratch']
  #allocation2 [shape = 'f32[192,256]{1,0:T(8,128)}', space=vmem, size = 0x30000, scoped, tag = 'scratch operand']
  %s0 = inlined_call_operand.hbm [shape: bf16[192,128], index: 0, kind: input, shape index: {}]
  %s1 = inlined_call_operand.hbm [shape: bf16[128,1024], index: 1, kind: input, shape index: {}]
  %s2 = inlined_call_operand.hbm [shape: f32[1,1024], index: 2, kind: input, shape index: {}]
  %s3 = inlined_call_operand.hbm [shape: bf16[192,1024], index: 3, kind: output, shape index: {}]
  %s4 = sld [smem:[#allocation0]]
  $region65: #{tpu_custom_call.1} parent=0
    _
  %s6 = ssub.s32 1, %s4
  %s7 = scalar_select 0, %s6, %s4
  $region1: #{tpu_custom_call.1} parent=0
    #allocation3 [shape = 'u8[49152]{0}', space=vmem, size = 0xc000, scoped, tag = 'input window, operand 0, single buffered']
    #allocation4 [shape = 's32[2]{0}', space=sflag, size = 0x8, scoped, tag = 'scoped memory for tpu_custom_call.1']
    #allocation5 [shape = 's32[2]{0}', space=sflag, size = 0x8, scoped, tag = 'scoped memory for tpu_custom_call.1']
    #allocation6 [shape = 'u8[131072]{0}', space=vmem, size = 0x20000, scoped, tag = 'input window, operand 1']
    #allocation7 [shape = 's32[2]{0}', space=sflag, size = 0x8, scoped, tag = 'scoped memory for tpu_custom_call.1']
    #allocation8 [shape = 'u8[2048]{0}', space=vmem, size = 0x800, scoped, tag = 'input window, operand 2']
    #allocation9 [shape = 'u8[196608]{0}', space=vmem, size = 0x30000, scoped, tag = 'output window, operand 0']
    %8 = vsyncpa [#allocation4], 0
    %9 = vsyncpa [#allocation7], 0
    %s10 = scalar_lea.sflag [#allocation7], 1
    %11 = vsyncpa %s10, 0
    %12 = vsyncpa [#allocation5], 0
    %s13 = scalar_lea.sflag [#allocation5], 1
    %14 = vsyncpa %s13, 0
    loop: start=0, step=1, limit=6
    $region2: #{tpu_custom_call.1} parent=1 // loop_pre_header
      _
    $region3: #{tpu_custom_call.1} parent=1 // loop_header
      %s16 = sphi 0, %s20
      %p17 = scmp.ge.s32.totalorder %s16, 6
      %s23 = sphi 0, %s42
      %s24 = sphi 0, %s38
      %s25 = sphi 0, %s34
      %s26 = sphi 0, %s23
      %s27 = sphi 0, %s24
      %s28 = sphi 0, %s25
      %s29 = sphi 0, %s26
      %s30 = sphi 0, %s27
      %s31 = sphi 0, %s28
      %s47 = sphi 0, %s49
      %s50 = sphi 0, %s47
      %s51 = sphi 0, %s50
      %s67 = sphi 0, %s51
      %s75 = sphi 0, %s77
      %s78 = sphi 0, %s75
      %s79 = sphi 0, %s78
      %s95 = sphi 0, %s79
      %s101 = sphi 0, %s103
      %s104 = sphi 0, %s101
      %s105 = sphi 0, %s104
      %s121 = sphi 0, %s105
      %s129 = sphi 0, %s131
      %s132 = sphi 0, %s129
      %s133 = sphi 0, %s132
      %s149 = sphi 0, %s133
    $region4: #{tpu_custom_call.1} parent=1 // loop_header_branch
      %19 = sbr.rel (%p17) target = $region8
    $region5: #{tpu_custom_call.1} parent=1 // loop_body
      %s21 = ssub.s32 %s16, 1
      %s22 = ssub.s32 %s16, 2
      %s32 = sadd.s32 1, %s25
      %p33 = scmp.ge.s32.totalorder %s32, 1
      %s34 = scalar_select %p33, 0, %s32
      %s35 = sadd.s32 1, %s24
      %s36 = scalar_select %p33, %s35, %s24
      %p37 = scmp.ge.s32.totalorder %s36, 4
      %s38 = scalar_select %p37, 0, %s36
      %s39 = sadd.s32 1, %s23
      %s40 = scalar_select %p37, %s39, %s23
      %p41 = scmp.ge.s32.totalorder %s40, 1
      %s42 = scalar_select %p41, 0, %s40
      %s43 = ssub.s32 %s23, %s42
      %s44 = ssub.s32 %s25, %s34
      %s45 = sor.u32 %s43, %s44
      %p46 = scmp.eq.s32.totalorder %s45, 0
      %s48 = sadd.s32 %s47, 1
      %s49 = scalar_select %p46, %s47, %s48
      %p52 = pneg %p46
      %p53 = scmp.eq.s32.totalorder %s16, 3
      %p54 = por %p52, %p53
      %p55 = scmp.ne.s32.totalorder %s47, %s50
      %p56 = scmp.eq.s32.totalorder %s16, 0
      %p57 = por %p55, %p56
      %p58 = scmp.ne.s32.totalorder %s47, %s50
      %p59 = scmp.eq.s32.totalorder %s21, 3
      %p60 = por %p58, %p59
      %p61 = scmp.ne.s32.totalorder %s50, %s51
      %p62 = scmp.eq.s32.totalorder %s21, 0
      %p63 = por %p61, %p62
      %p64 = scmp.ne.s32.totalorder %s50, %s51
      %p65 = scmp.eq.s32.totalorder %s22, 3
      %p66 = por %p64, %p65
      %p68 = scmp.ne.s32.totalorder %s51, %s67
      %p69 = scmp.eq.s32.totalorder %s22, 0
      %p70 = por %p68, %p69
      %s71 = ssub.s32 %s25, %s34
      %s72 = ssub.s32 %s24, %s38
      %s73 = sor.u32 %s71, %s72
      %p74 = scmp.eq.s32.totalorder %s73, 0
      %s76 = sadd.s32 %s75, 1
      %s77 = scalar_select %p74, %s75, %s76
      %p80 = pneg %p74
      %p81 = scmp.eq.s32.totalorder %s16, 3
      %p82 = por %p80, %p81
      %p83 = scmp.ne.s32.totalorder %s75, %s78
      %p84 = scmp.eq.s32.totalorder %s16, 0
      %p85 = por %p83, %p84
      %p86 = scmp.ne.s32.totalorder %s75, %s78
      %p87 = scmp.eq.s32.totalorder %s21, 3
      %p88 = por %p86, %p87
      %p89 = scmp.ne.s32.totalorder %s78, %s79
      %p90 = scmp.eq.s32.totalorder %s21, 0
      %p91 = por %p89, %p90
      %p92 = scmp.ne.s32.totalorder %s78, %s79
      %p93 = scmp.eq.s32.totalorder %s22, 3
      %p94 = por %p92, %p93
      %p96 = scmp.ne.s32.totalorder %s79, %s95
      %p97 = scmp.eq.s32.totalorder %s22, 0
      %p98 = por %p96, %p97
      %s99 = ssub.s32 %s24, %s38
      %p100 = scmp.eq.s32.totalorder %s99, 0
      %s102 = sadd.s32 %s101, 1
      %s103 = scalar_select %p100, %s101, %s102
      %p106 = pneg %p100
      %p107 = scmp.eq.s32.totalorder %s16, 3
      %p108 = por %p106, %p107
      %p109 = scmp.ne.s32.totalorder %s101, %s104
      %p110 = scmp.eq.s32.totalorder %s16, 0
      %p111 = por %p109, %p110
      %p112 = scmp.ne.s32.totalorder %s101, %s104
      %p113 = scmp.eq.s32.totalorder %s21, 3
      %p114 = por %p112, %p113
      %p115 = scmp.ne.s32.totalorder %s104, %s105
      %p116 = scmp.eq.s32.totalorder %s21, 0
      %p117 = por %p115, %p116
      %p118 = scmp.ne.s32.totalorder %s104, %s105
      %p119 = scmp.eq.s32.totalorder %s22, 3
      %p120 = por %p118, %p119
      %p122 = scmp.ne.s32.totalorder %s105, %s121
      %p123 = scmp.eq.s32.totalorder %s22, 0
      %p124 = por %p122, %p123
      %s125 = ssub.s32 %s23, %s42
      %s126 = ssub.s32 %s24, %s38
      %s127 = sor.u32 %s125, %s126
      %p128 = scmp.eq.s32.totalorder %s127, 0
      %s130 = sadd.s32 %s129, 1
      %s131 = scalar_select %p128, %s129, %s130
      %p134 = pneg %p128
      %p135 = scmp.eq.s32.totalorder %s16, 3
      %p136 = por %p134, %p135
      %p137 = scmp.ne.s32.totalorder %s129, %s132
      %p138 = scmp.eq.s32.totalorder %s16, 0
      %p139 = por %p137, %p138
      %p140 = scmp.ne.s32.totalorder %s129, %s132
      %p141 = scmp.eq.s32.totalorder %s21, 3
      %p142 = por %p140, %p141
      %p143 = scmp.ne.s32.totalorder %s132, %s133
      %p144 = scmp.eq.s32.totalorder %s21, 0
      %p145 = por %p143, %p144
      %p146 = scmp.ne.s32.totalorder %s132, %s133
      %p147 = scmp.eq.s32.totalorder %s22, 3
      %p148 = por %p146, %p147
      %p150 = scmp.ne.s32.totalorder %s133, %s149
      %p151 = scmp.eq.s32.totalorder %s22, 0
      %p152 = por %p150, %p151
      %p153 = scmp.le.s32.totalorder 1, %s16
      %p154 = scmp.lt.s32.totalorder %s16, 5
      %p155 = pnand %p153, %p154
      %p156 = pneg %p155
      // Predicated region
      $region9: #{tpu_custom_call.1} parent=5 // pred_check
        _
      $region10: #{tpu_custom_call.1} parent=5 // pred_check_branch
        %158 = sbr.rel (%p155) target = $region12
      $region11: #{tpu_custom_call.1} parent=5 // pred_region
        %s159 = ssub.s32 %s16, 1
        // Predicated region
        $region13: #{tpu_custom_call.1} parent=11 // pred_check
          %p160 = pneg %p63
        $region14: #{tpu_custom_call.1} parent=11 // pred_check_branch
          %162 = sbr.rel (%p160) target = $region16
        $region15: #{tpu_custom_call.1} parent=11 // pred_region
          %s163 = smul.u32 24, %s26
          %s165 = ssub.s32 1536, 1536
          %166 = vsyncadd [#allocation4], %s165
          %s167 = sadd.s32 %s28, %s163
          %s168 = smul.addr %s167, 64
          %s169 = scalar_lea.hbm %s0, %s168
          %s170 = sshll.u32 [#allocation3], 4
          %s171 = int_to_ptr.vmem [resolvable:$true] %s170
          %176 = dma.hbm_to_vmem [thread:$0]  %s169, 1536, %s171, [#allocation4], 64, 64, 4
        $region16: #{tpu_custom_call.1} parent=11 // pred_fallthru
          _
      $region12: #{tpu_custom_call.1} parent=5 // pred_fallthru
        _
      %p177 = scmp.lt.s32.totalorder %s16, 4
      // Predicated region
      $region17: #{tpu_custom_call.1} parent=5 // pred_check
        %p178 = pneg %p177
      $region18: #{tpu_custom_call.1} parent=5 // pred_check_branch
        %180 = sbr.rel (%p178) target = $region20
      $region19: #{tpu_custom_call.1} parent=5 // pred_region
        // Predicated region
        $region21: #{tpu_custom_call.1} parent=19 // pred_check
          %p181 = pneg %p85
        $region22: #{tpu_custom_call.1} parent=19 // pred_check_branch
          %183 = sbr.rel (%p181) target = $region24
        $region23: #{tpu_custom_call.1} parent=19 // pred_region
          %s184 = sand.u32 %s16, 1
          %s185 = scalar_lea.sflag [#allocation7], %s184
          %s186 = sand.u32 %s75, 1
          %s187 = smul.addr %s186, 128
          %s188 = scalar_lea.vmem [#allocation6], %s187
          %s189 = smul.u32 16, %s25
          %s190 = smul.u32 2, %s24
          %s192 = ssub.s32 2048, 2048
          %193 = vsyncadd %s185, %s192
          %s194 = smul.addr %s189, 8
          %s195 = sadd.s32 %s190, %s194
          %s196 = smul.addr %s195, 64
          %s197 = scalar_lea.hbm %s1, %s196
          %s198 = sshll.u32 %s188, 4
          %s199 = int_to_ptr.vmem [resolvable:$true] %s198
          %204 = dma.hbm_to_vmem [thread:$0]  %s197, 2048, %s199, %s185, 512, 128, 8
        $region24: #{tpu_custom_call.1} parent=19 // pred_fallthru
          _
        // Predicated region
        $region25: #{tpu_custom_call.1} parent=19 // pred_check
          %p205 = pneg %p111
        $region26: #{tpu_custom_call.1} parent=19 // pred_check_branch
          %207 = sbr.rel (%p205) target = $region28
        $region27: #{tpu_custom_call.1} parent=19 // pred_region
          %s208 = sand.u32 %s16, 1
          %s209 = scalar_lea.sflag [#allocation7], %s208
          %s210 = sand.u32 %s101, 1
          %s211 = smul.addr %s210, 2
          %s212 = scalar_lea.vmem [#allocation8], %s211
          %s213 = smul.u32 2, %s24
          %s215 = ssub.s32 32, 32
          %216 = vsyncadd %s209, %s215
          %s217 = smul.addr %s213, 16
          %s218 = scalar_lea.hbm %s2, %s217
          %s220 = sshll.u32 %s212, 4
          %s221 = int_to_ptr.vmem [resolvable:$true] %s220
          %223 = dma.hbm_to_vmem [thread:$0]  %s218, 32, %s221, %s209
        $region28: #{tpu_custom_call.1} parent=19 // pred_fallthru
          _
      $region20: #{tpu_custom_call.1} parent=5 // pred_fallthru
        _
      %p224 = scmp.le.s32.totalorder 1, %s16
      %p225 = scmp.lt.s32.totalorder %s16, 5
      %p226 = pnand %p224, %p225
      %p227 = pneg %p226
      // Predicated region
      $region29: #{tpu_custom_call.1} parent=5 // pred_check
        _
      $region30: #{tpu_custom_call.1} parent=5 // pred_check_branch
        %229 = sbr.rel (%p226) target = $region32
      $region31: #{tpu_custom_call.1} parent=5 // pred_region
        %s230 = ssub.s32 %s16, 1
        // Predicated region
        $region33: #{tpu_custom_call.1} parent=31 // pred_check
          %p231 = pneg %p63
        $region34: #{tpu_custom_call.1} parent=31 // pred_check_branch
          %233 = sbr.rel (%p231) target = $region36
        $region35: #{tpu_custom_call.1} parent=31 // pred_region
          %234 = dma.done [#allocation4], 1536
        $region36: #{tpu_custom_call.1} parent=31 // pred_fallthru
          _
        %s235 = sand.u32 %s21, 1
        %s236 = scalar_lea.sflag [#allocation7], %s235
        %s237 = sand.u32 %s78, 1
        %s238 = smul.addr %s237, 128
        %s239 = scalar_lea.vmem [#allocation6], %s238
        // Predicated region
        $region37: #{tpu_custom_call.1} parent=31 // pred_check
          %p240 = pneg %p91
        $region38: #{tpu_custom_call.1} parent=31 // pred_check_branch
          %242 = sbr.rel (%p240) target = $region40
        $region39: #{tpu_custom_call.1} parent=31 // pred_region
          %243 = dma.done %s236, 2048
        $region40: #{tpu_custom_call.1} parent=31 // pred_fallthru
          _
        %s244 = sand.u32 %s21, 1
        %s245 = scalar_lea.sflag [#allocation7], %s244
        %s246 = sand.u32 %s104, 1
        %s247 = smul.addr %s246, 2
        %s248 = scalar_lea.vmem [#allocation8], %s247
        // Predicated region
        $region41: #{tpu_custom_call.1} parent=31 // pred_check
          %p249 = pneg %p117
        $region42: #{tpu_custom_call.1} parent=31 // pred_check_branch
          %251 = sbr.rel (%p249) target = $region44
        $region43: #{tpu_custom_call.1} parent=31 // pred_region
          %252 = dma.done %s245, 32
        $region44: #{tpu_custom_call.1} parent=31 // pred_fallthru
          _
        %p253 = pneg %p63
        %p254 = pneg %p60
        %s255 = sand.u32 %s21, 1
        %s256 = scalar_lea.sflag [#allocation7], %s255
        %s257 = sand.u32 %s78, 1
        %s258 = smul.addr %s257, 128
        %s259 = scalar_lea.vmem [#allocation6], %s258
        %p260 = pneg %p91
        %p261 = pneg %p88
        %s262 = sand.u32 %s21, 1
        %s263 = scalar_lea.sflag [#allocation7], %s262
        %s264 = sand.u32 %s104, 1
        %s265 = smul.addr %s264, 2
        %s266 = scalar_lea.vmem [#allocation8], %s265
        %p267 = pneg %p117
        %p268 = pneg %p114
        %p269 = pneg %p145
        %p270 = pneg %p142
        %s271 = sand.u32 %s132, 1
        %s272 = scalar_lea.sflag [#allocation5], %s271
        %s273 = sand.u32 %s132, 1
        %s274 = smul.addr %s273, 192
        %s275 = scalar_lea.vmem [#allocation9], %s274
        %s276 = smul.u32 24, %s26
        %s277 = smul.u32 16, %s28
        %s278 = smul.u32 2, %s27
        %s279 = smul.u32 2, %s27
        %s280 = smul.u32 24, %s26
        %s281 = smul.u32 2, %s27
        %p283 = scmp.eq.s32.totalorder %s28, 0
        // Predicated region
        $region45: #{tpu_custom_call.1} parent=31 // pred_check
          %p284 = pneg %p283
        $region46: #{tpu_custom_call.1} parent=31 // pred_check_branch
          %286 = sbr.rel (%p284) target = $region48
        $region47: #{tpu_custom_call.1} parent=31 // pred_region
          %287 = vst [vmem:[#allocation2] sm:$0xff] 0.0
          %288 = vst [vmem:[#allocation2 + $0x8] sm:$0xff] 0.0
          %289 = vst [vmem:[#allocation2 + $0x10] sm:$0xff] 0.0
          %290 = vst [vmem:[#allocation2 + $0x18] sm:$0xff] 0.0
          %291 = vst [vmem:[#allocation2 + $0x20] sm:$0xff] 0.0
          %292 = vst [vmem:[#allocation2 + $0x28] sm:$0xff] 0.0
          %293 = vst [vmem:[#allocation2 + $0x30] sm:$0xff] 0.0
          %294 = vst [vmem:[#allocation2 + $0x38] sm:$0xff] 0.0
          %295 = vst [vmem:[#allocation2 + $0x40] sm:$0xff] 0.0
          %296 = vst [vmem:[#allocation2 + $0x48] sm:$0xff] 0.0
          %297 = vst [vmem:[#allocation2 + $0x50] sm:$0xff] 0.0
          %298 = vst [vmem:[#allocation2 + $0x58] sm:$0xff] 0.0
          %299 = vst [vmem:[#allocation2 + $0x60] sm:$0xff] 0.0
          %300 = vst [vmem:[#allocation2 + $0x68] sm:$0xff] 0.0
          %301 = vst [vmem:[#allocation2 + $0x70] sm:$0xff] 0.0
          %302 = vst [vmem:[#allocation2 + $0x78] sm:$0xff] 0.0
          %303 = vst [vmem:[#allocation2 + $0x80] sm:$0xff] 0.0
          %304 = vst [vmem:[#allocation2 + $0x88] sm:$0xff] 0.0
          %305 = vst [vmem:[#allocation2 + $0x90] sm:$0xff] 0.0
          %306 = vst [vmem:[#allocation2 + $0x98] sm:$0xff] 0.0
          %307 = vst [vmem:[#allocation2 + $0xa0] sm:$0xff] 0.0
          %308 = vst [vmem:[#allocation2 + $0xa8] sm:$0xff] 0.0
          %309 = vst [vmem:[#allocation2 + $0xb0] sm:$0xff] 0.0
          %310 = vst [vmem:[#allocation2 + $0xb8] sm:$0xff] 0.0
          %311 = vst [vmem:[#allocation2 + $0xc0] sm:$0xff] 0.0
          %312 = vst [vmem:[#allocation2 + $0xc8] sm:$0xff] 0.0
          %313 = vst [vmem:[#allocation2 + $0xd0] sm:$0xff] 0.0
          %314 = vst [vmem:[#allocation2 + $0xd8] sm:$0xff] 0.0
          %315 = vst [vmem:[#allocation2 + $0xe0] sm:$0xff] 0.0
          %316 = vst [vmem:[#allocation2 + $0xe8] sm:$0xff] 0.0
          %317 = vst [vmem:[#allocation2 + $0xf0] sm:$0xff] 0.0
          %318 = vst [vmem:[#allocation2 + $0xf8] sm:$0xff] 0.0
          %319 = vst [vmem:[#allocation2 + $0x100] sm:$0xff] 0.0
          %320 = vst [vmem:[#allocation2 + $0x108] sm:$0xff] 0.0
          %321 = vst [vmem:[#allocation2 + $0x110] sm:$0xff] 0.0
          %322 = vst [vmem:[#allocation2 + $0x118] sm:$0xff] 0.0
          %323 = vst [vmem:[#allocation2 + $0x120] sm:$0xff] 0.0
          %324 = vst [vmem:[#allocation2 + $0x128] sm:$0xff] 0.0
          %325 = vst [vmem:[#allocation2 + $0x130] sm:$0xff] 0.0
          %326 = vst [vmem:[#allocation2 + $0x138] sm:$0xff] 0.0
          %327 = vst [vmem:[#allocation2 + $0x140] sm:$0xff] 0.0
          %328 = vst [vmem:[#allocation2 + $0x148] sm:$0xff] 0.0
          %329 = vst [vmem:[#allocation2 + $0x150] sm:$0xff] 0.0
          %330 = vst [vmem:[#allocation2 + $0x158] sm:$0xff] 0.0
          %331 = vst [vmem:[#allocation2 + $0x160] sm:$0xff] 0.0
          %332 = vst [vmem:[#allocation2 + $0x168] sm:$0xff] 0.0
          %333 = vst [vmem:[#allocation2 + $0x170] sm:$0xff] 0.0
          %334 = vst [vmem:[#allocation2 + $0x178] sm:$0xff] 0.0
        $region48: #{tpu_custom_call.1} parent=31 // pred_fallthru
          _
        %v335 = vld [vmem:[#allocation2] sm:$0xff]
        %v336 = vld [vmem:[#allocation2 + $0x8] sm:$0xff]
        %v337 = vld [vmem:[#allocation2 + $0x10] sm:$0xff]
        %v338 = vld [vmem:[#allocation2 + $0x18] sm:$0xff]
        %v339 = vld [vmem:[#allocation2 + $0x20] sm:$0xff]
        %v340 = vld [vmem:[#allocation2 + $0x28] sm:$0xff]
        %v341 = vld [vmem:[#allocation2 + $0x30] sm:$0xff]
        %v342 = vld [vmem:[#allocation2 + $0x38] sm:$0xff]
        %v343 = vld [vmem:[#allocation2 + $0x40] sm:$0xff]
        %v344 = vld [vmem:[#allocation2 + $0x48] sm:$0xff]
        %v345 = vld [vmem:[#allocation2 + $0x50] sm:$0xff]
        %v346 = vld [vmem:[#allocation2 + $0x58] sm:$0xff]
        %v347 = vld [vmem:[#allocation2 + $0x60] sm:$0xff]
        %v348 = vld [vmem:[#allocation2 + $0x68] sm:$0xff]
        %v349 = vld [vmem:[#allocation2 + $0x70] sm:$0xff]
        %v350 = vld [vmem:[#allocation2 + $0x78] sm:$0xff]
        %v351 = vld [vmem:[#allocation2 + $0x80] sm:$0xff]
        %v352 = vld [vmem:[#allocation2 + $0x88] sm:$0xff]
        %v353 = vld [vmem:[#allocation2 + $0x90] sm:$0xff]
        %v354 = vld [vmem:[#allocation2 + $0x98] sm:$0xff]
        %v355 = vld [vmem:[#allocation2 + $0xa0] sm:$0xff]
        %v356 = vld [vmem:[#allocation2 + $0xa8] sm:$0xff]
        %v357 = vld [vmem:[#allocation2 + $0xb0] sm:$0xff]
        %v358 = vld [vmem:[#allocation2 + $0xb8] sm:$0xff]
        %v359 = vld [vmem:[#allocation2 + $0xc0] sm:$0xff]
        %v360 = vld [vmem:[#allocation2 + $0xc8] sm:$0xff]
        %v361 = vld [vmem:[#allocation2 + $0xd0] sm:$0xff]
        %v362 = vld [vmem:[#allocation2 + $0xd8] sm:$0xff]
        %v363 = vld [vmem:[#allocation2 + $0xe0] sm:$0xff]
        %v364 = vld [vmem:[#allocation2 + $0xe8] sm:$0xff]
        %v365 = vld [vmem:[#allocation2 + $0xf0] sm:$0xff]
        %v366 = vld [vmem:[#allocation2 + $0xf8] sm:$0xff]
        %v367 = vld [vmem:[#allocation2 + $0x100] sm:$0xff]
        %v368 = vld [vmem:[#allocation2 + $0x108] sm:$0xff]
        %v369 = vld [vmem:[#allocation2 + $0x110] sm:$0xff]
        %v370 = vld [vmem:[#allocation2 + $0x118] sm:$0xff]
        %v371 = vld [vmem:[#allocation2 + $0x120] sm:$0xff]
        %v372 = vld [vmem:[#allocation2 + $0x128] sm:$0xff]
        %v373 = vld [vmem:[#allocation2 + $0x130] sm:$0xff]
        %v374 = vld [vmem:[#allocation2 + $0x138] sm:$0xff]
        %v375 = vld [vmem:[#allocation2 + $0x140] sm:$0xff]
        %v376 = vld [vmem:[#allocation2 + $0x148] sm:$0xff]
        %v377 = vld [vmem:[#allocation2 + $0x150] sm:$0xff]
        %v378 = vld [vmem:[#allocation2 + $0x158] sm:$0xff]
        %v379 = vld [vmem:[#allocation2 + $0x160] sm:$0xff]
        %v380 = vld [vmem:[#allocation2 + $0x168] sm:$0xff]
        %v381 = vld [vmem:[#allocation2 + $0x170] sm:$0xff]
        %v382 = vld [vmem:[#allocation2 + $0x178] sm:$0xff]
        %v383 = vld [vmem:[#allocation3] sm:$0xf]
        %v384 = vld [vmem:[#allocation3 + $0x4] sm:$0xf]
        %v385 = vld [vmem:[#allocation3 + $0x8] sm:$0xf]
        %v386 = vld [vmem:[#allocation3 + $0xc] sm:$0xf]
        %v387 = vld [vmem:[#allocation3 + $0x10] sm:$0xf]
        %v388 = vld [vmem:[#allocation3 + $0x14] sm:$0xf]
        %v389 = vld [vmem:[#allocation3 + $0x18] sm:$0xf]
        %v390 = vld [vmem:[#allocation3 + $0x1c] sm:$0xf]
        %v391 = vld [vmem:[#allocation3 + $0x20] sm:$0xf]
        %v392 = vld [vmem:[#allocation3 + $0x24] sm:$0xf]
        %v393 = vld [vmem:[#allocation3 + $0x28] sm:$0xf]
        %v394 = vld [vmem:[#allocation3 + $0x2c] sm:$0xf]
        %v395 = vld [vmem:[#allocation3 + $0x30] sm:$0xf]
        %v396 = vld [vmem:[#allocation3 + $0x34] sm:$0xf]
        %v397 = vld [vmem:[#allocation3 + $0x38] sm:$0xf]
        %v398 = vld [vmem:[#allocation3 + $0x3c] sm:$0xf]
        %v399 = vld [vmem:[#allocation3 + $0x40] sm:$0xf]
        %v400 = vld [vmem:[#allocation3 + $0x44] sm:$0xf]
        %v401 = vld [vmem:[#allocation3 + $0x48] sm:$0xf]
        %v402 = vld [vmem:[#allocation3 + $0x4c] sm:$0xf]
        %v403 = vld [vmem:[#allocation3 + $0x50] sm:$0xf]
        %v404 = vld [vmem:[#allocation3 + $0x54] sm:$0xf]
        %v405 = vld [vmem:[#allocation3 + $0x58] sm:$0xf]
        %v406 = vld [vmem:[#allocation3 + $0x5c] sm:$0xf]
        %v407 = vld [vmem:[%s239] sm:$0xff]
        %v408 = vld [vmem:[%s239 + $0x8] sm:$0xff]
        %v409 = vld [vmem:[%s239 + $0x10] sm:$0xff]
        %v410 = vld [vmem:[%s239 + $0x18] sm:$0xff]
        %v411 = vld [vmem:[%s239 + $0x20] sm:$0xff]
        %v412 = vld [vmem:[%s239 + $0x28] sm:$0xff]
        %v413 = vld [vmem:[%s239 + $0x30] sm:$0xff]
        %v414 = vld [vmem:[%s239 + $0x38] sm:$0xff]
        %v415 = vld [vmem:[%s239 + $0x40] sm:$0xff]
        %v416 = vld [vmem:[%s239 + $0x48] sm:$0xff]
        %v417 = vld [vmem:[%s239 + $0x50] sm:$0xff]
        %v418 = vld [vmem:[%s239 + $0x58] sm:$0xff]
        %v419 = vld [vmem:[%s239 + $0x60] sm:$0xff]
        %v420 = vld [vmem:[%s239 + $0x68] sm:$0xff]
        %v421 = vld [vmem:[%s239 + $0x70] sm:$0xff]
        %v422 = vld [vmem:[%s239 + $0x78] sm:$0xff]
        %v447 = vunpack.c.l.b16 %v383
        %v448 = vunpack.c.l.b16 %v384
        %v449 = vunpack.c.l.b16 %v385
        %v450 = vunpack.c.l.b16 %v386
        %v451 = vunpack.c.l.b16 %v387
        %v452 = vunpack.c.l.b16 %v388
        %v453 = vunpack.c.l.b16 %v389
        %v454 = vunpack.c.l.b16 %v390
        %v455 = vunpack.c.l.b16 %v391
        %v456 = vunpack.c.l.b16 %v392
        %v457 = vunpack.c.l.b16 %v393
        %v458 = vunpack.c.l.b16 %v394
        %v459 = vunpack.c.l.b16 %v395
        %v460 = vunpack.c.l.b16 %v396
        %v461 = vunpack.c.l.b16 %v397
        %v462 = vunpack.c.l.b16 %v398
        %v463 = vunpack.c.l.b16 %v399
        %v464 = vunpack.c.l.b16 %v400
        %v465 = vunpack.c.l.b16 %v401
        %v466 = vunpack.c.l.b16 %v402
        %v467 = vunpack.c.l.b16 %v403
        %v468 = vunpack.c.l.b16 %v404
        %v469 = vunpack.c.l.b16 %v405
        %v470 = vunpack.c.l.b16 %v406
        %v471 = vpack.c.b16 %v448, %v447
        %v472 = vpack.c.b16 %v450, %v449
        %v473 = vpack.c.b16 %v452, %v451
        %v474 = vpack.c.b16 %v454, %v453
        %v475 = vpack.c.b16 %v456, %v455
        %v476 = vpack.c.b16 %v458, %v457
        %v477 = vpack.c.b16 %v460, %v459
        %v478 = vpack.c.b16 %v462, %v461
        %v479 = vpack.c.b16 %v464, %v463
        %v480 = vpack.c.b16 %v466, %v465
        %v481 = vpack.c.b16 %v468, %v467
        %v482 = vpack.c.b16 %v470, %v469
        %v511 = vunpack.c.l.b16 %v407
        %v512 = vunpack.c.h.b16 %v407
        %v513 = vunpack.c.l.b16 %v408
        %v514 = vunpack.c.h.b16 %v408
        %v515 = vunpack.c.l.b16 %v409
        %v516 = vunpack.c.h.b16 %v409
        %v517 = vunpack.c.l.b16 %v410
        %v518 = vunpack.c.h.b16 %v410
        %v519 = vunpack.c.l.b16 %v411
        %v520 = vunpack.c.h.b16 %v411
        %v521 = vunpack.c.l.b16 %v412
        %v522 = vunpack.c.h.b16 %v412
        %v523 = vunpack.c.l.b16 %v413
        %v524 = vunpack.c.h.b16 %v413
        %v525 = vunpack.c.l.b16 %v414
        %v526 = vunpack.c.h.b16 %v414
        %v527 = vunpack.c.l.b16 %v415
        %v528 = vunpack.c.h.b16 %v415
        %v529 = vunpack.c.l.b16 %v416
        %v530 = vunpack.c.h.b16 %v416
        %v531 = vunpack.c.l.b16 %v417
        %v532 = vunpack.c.h.b16 %v417
        %v533 = vunpack.c.l.b16 %v418
        %v534 = vunpack.c.h.b16 %v418
        %v535 = vunpack.c.l.b16 %v419
        %v536 = vunpack.c.h.b16 %v419
        %v537 = vunpack.c.l.b16 %v420
        %v538 = vunpack.c.h.b16 %v420
        %v539 = vunpack.c.l.b16 %v421
        %v540 = vunpack.c.h.b16 %v421
        %v541 = vunpack.c.l.b16 %v422
        %v542 = vunpack.c.h.b16 %v422
        %v543 = vpack.c.b16 %v513, %v511
        %v544 = vpack.c.b16 %v514, %v512
        %v545 = vpack.c.b16 %v517, %v515
        %v546 = vpack.c.b16 %v518, %v516
        %v547 = vpack.c.b16 %v521, %v519
        %v548 = vpack.c.b16 %v522, %v520
        %v549 = vpack.c.b16 %v525, %v523
        %v550 = vpack.c.b16 %v526, %v524
        %v551 = vpack.c.b16 %v529, %v527
        %v552 = vpack.c.b16 %v530, %v528
        %v553 = vpack.c.b16 %v533, %v531
        %v554 = vpack.c.b16 %v534, %v532
        %v555 = vpack.c.b16 %v537, %v535
        %v556 = vpack.c.b16 %v538, %v536
        %v557 = vpack.c.b16 %v541, %v539
        %v558 = vpack.c.b16 %v542, %v540
        %575 = vmatprep.subr.bf16.mxu0 %v544
        %576 = vmatpush1.bf16.msra.mxu0 %v543
        %577 = vmatprep.subr.bf16.mxu0 %v546
        %578 = vmatpush1.bf16.msra.mxu0 %v545
        %579 = vmatprep.subr.bf16.mxu0 %v548
        %580 = vmatpush1.bf16.msra.mxu0 %v547
        %581 = vmatprep.subr.bf16.mxu0 %v550
        %582 = vmatpush1.bf16.msra.mxu0 %v549
        %583 = vmatprep.subr.bf16.mxu0 %v552
        %584 = vmatpush1.bf16.msra.mxu0 %v551
        %585 = vmatprep.subr.bf16.mxu0 %v554
        %586 = vmatpush1.bf16.msra.mxu0 %v553
        %587 = vmatprep.subr.bf16.mxu0 %v556
        %588 = vmatpush1.bf16.msra.mxu0 %v555
        %589 = vmatprep.subr.bf16.mxu0 %v558
        %590 = vmatpush1.bf16.msra.mxu0 %v557
        %591 = vmatprep.subr.bf16.mxu0 0
        %592 = vmatpush1.bf16.msra.mxu0 0
        %593 = vmatprep.subr.bf16.mxu0 0
        %594 = vmatpush1.bf16.msra.mxu0 0
        %595 = vmatprep.subr.bf16.mxu0 0
        %596 = vmatpush1.bf16.msra.mxu0 0
        %597 = vmatprep.subr.bf16.mxu0 0
        %598 = vmatpush1.bf16.msra.mxu0 0
        %599 = vmatprep.subr.bf16.mxu0 0
        %600 = vmatpush1.bf16.msra.mxu0 0
        %601 = vmatprep.subr.bf16.mxu0 0
        %602 = vmatpush1.bf16.msra.mxu0 0
        %603 = vmatprep.subr.bf16.mxu0 0
        %604 = vmatpush1.bf16.msra.mxu0 0
        %605 = vmatprep.subr.bf16.mxu0 0
        %606 = vmatpush1.bf16.msra.mxu0 0
        %607 = vmatprep.mubr.bf16.mxu0 0
        %608 = vmatmul.mubr.bf16.gmra.mrb[0].mxu0 %v471
        %v609 = vpop.f32.mrb[0].mxu0
        %v610 = vadd.f32 0.0, %v609
        %v611 = vpop.f32.mrb[0].mxu0
        %v612 = vadd.f32 0.0, %v611
        %v613 = vpop.f32.mrb[0].mxu0
        %v614 = vadd.f32 0.0, %v613
        %v615 = vpop.f32.mrb[0].mxu0
        %v616 = vadd.f32 0.0, %v615
        %617 = vmatprep.mubr.bf16.mxu0 0
        %618 = vmatmul.mubr.bf16.gmra.mrb[0].mxu0 %v472
        %v619 = vpop.f32.mrb[0].mxu0
        %v620 = vadd.f32 0.0, %v619
        %v621 = vpop.f32.mrb[0].mxu0
        %v622 = vadd.f32 0.0, %v621
        %v623 = vpop.f32.mrb[0].mxu0
        %v624 = vadd.f32 0.0, %v623
        %v625 = vpop.f32.mrb[0].mxu0
        %v626 = vadd.f32 0.0, %v625
        %627 = vmatprep.mubr.bf16.mxu0 0
        %628 = vmatmul.mubr.bf16.gmra.mrb[0].mxu0 %v473
        %v629 = vpop.f32.mrb[0].mxu0
        %v630 = vadd.f32 0.0, %v629
        %v631 = vpop.f32.mrb[0].mxu0
        %v632 = vadd.f32 0.0, %v631
        %v633 = vpop.f32.mrb[0].mxu0
        %v634 = vadd.f32 0.0, %v633
        %v635 = vpop.f32.mrb[0].mxu0
        %v636 = vadd.f32 0.0, %v635
        %637 = vmatprep.mubr.bf16.mxu0 0
        %638 = vmatmul.mubr.bf16.gmra.mrb[0].mxu0 %v474
        %v639 = vpop.f32.mrb[0].mxu0
        %v640 = vadd.f32 0.0, %v639
        %v641 = vpop.f32.mrb[0].mxu0
        %v642 = vadd.f32 0.0, %v641
        %v643 = vpop.f32.mrb[0].mxu0
        %v644 = vadd.f32 0.0, %v643
        %v645 = vpop.f32.mrb[0].mxu0
        %v646 = vadd.f32 0.0, %v645
        %647 = vmatprep.mubr.bf16.mxu0 0
        %648 = vmatmul.mubr.bf16.gmra.mrb[0].mxu0 %v475
        %v649 = vpop.f32.mrb[0].mxu0
        %v650 = vadd.f32 0.0, %v649
        %v651 = vpop.f32.mrb[0].mxu0
        %v652 = vadd.f32 0.0, %v651
        %v653 = vpop.f32.mrb[0].mxu0
        %v654 = vadd.f32 0.0, %v653
        %v655 = vpop.f32.mrb[0].mxu0
        %v656 = vadd.f32 0.0, %v655
        %657 = vmatprep.mubr.bf16.mxu0 0
        %658 = vmatmul.mubr.bf16.gmra.mrb[0].mxu0 %v476
        %v659 = vpop.f32.mrb[0].mxu0
        %v660 = vadd.f32 0.0, %v659
        %v661 = vpop.f32.mrb[0].mxu0
        %v662 = vadd.f32 0.0, %v661
        %v663 = vpop.f32.mrb[0].mxu0
        %v664 = vadd.f32 0.0, %v663
        %v665 = vpop.f32.mrb[0].mxu0
        %v666 = vadd.f32 0.0, %v665
        %667 = vmatprep.mubr.bf16.mxu0 0
        %668 = vmatmul.mubr.bf16.gmra.mrb[0].mxu0 %v477
        %v669 = vpop.f32.mrb[0].mxu0
        %v670 = vadd.f32 0.0, %v669
        %v671 = vpop.f32.mrb[0].mxu0
        %v672 = vadd.f32 0.0, %v671
        %v673 = vpop.f32.mrb[0].mxu0
        %v674 = vadd.f32 0.0, %v673
        %v675 = vpop.f32.mrb[0].mxu0
        %v676 = vadd.f32 0.0, %v675
        %677 = vmatprep.mubr.bf16.mxu0 0
        %678 = vmatmul.mubr.bf16.gmra.mrb[0].mxu0 %v478
        %v679 = vpop.f32.mrb[0].mxu0
        %v680 = vadd.f32 0.0, %v679
        %v681 = vpop.f32.mrb[0].mxu0
        %v682 = vadd.f32 0.0, %v681
        %v683 = vpop.f32.mrb[0].mxu0
        %v684 = vadd.f32 0.0, %v683
        %v685 = vpop.f32.mrb[0].mxu0
        %v686 = vadd.f32 0.0, %v685
        %687 = vmatprep.mubr.bf16.mxu0 0
        %688 = vmatmul.mubr.bf16.gmra.mrb[0].mxu0 %v479
        %v689 = vpop.f32.mrb[0].mxu0
        %v690 = vadd.f32 0.0, %v689
        %v691 = vpop.f32.mrb[0].mxu0
        %v692 = vadd.f32 0.0, %v691
        %v693 = vpop.f32.mrb[0].mxu0
        %v694 = vadd.f32 0.0, %v693
        %v695 = vpop.f32.mrb[0].mxu0
        %v696 = vadd.f32 0.0, %v695
        %697 = vmatprep.mubr.bf16.mxu0 0
        %698 = vmatmul.mubr.bf16.gmra.mrb[0].mxu0 %v480
        %v699 = vpop.f32.mrb[0].mxu0
        %v700 = vadd.f32 0.0, %v699
        %v701 = vpop.f32.mrb[0].mxu0
        %v702 = vadd.f32 0.0, %v701
        %v703 = vpop.f32.mrb[0].mxu0
        %v704 = vadd.f32 0.0, %v703
        %v705 = vpop.f32.mrb[0].mxu0
        %v706 = vadd.f32 0.0, %v705
        %707 = vmatprep.mubr.bf16.mxu0 0
        %708 = vmatmul.mubr.bf16.gmra.mrb[0].mxu0 %v481
        %v709 = vpop.f32.mrb[0].mxu0
        %v710 = vadd.f32 0.0, %v709
        %v711 = vpop.f32.mrb[0].mxu0
        %v712 = vadd.f32 0.0, %v711
        %v713 = vpop.f32.mrb[0].mxu0
        %v714 = vadd.f32 0.0, %v713
        %v715 = vpop.f32.mrb[0].mxu0
        %v716 = vadd.f32 0.0, %v715
        %717 = vmatprep.mubr.bf16.mxu0 0
        %718 = vmatmul.mubr.bf16.gmra.mrb[0].mxu0 %v482
        %v719 = vpop.f32.mrb[0].mxu0
        %v720 = vadd.f32 0.0, %v719
        %v721 = vpop.f32.mrb[0].mxu0
        %v722 = vadd.f32 0.0, %v721
        %v723 = vpop.f32.mrb[0].mxu0
        %v724 = vadd.f32 0.0, %v723
        %v725 = vpop.f32.mrb[0].mxu0
        %v726 = vadd.f32 0.0, %v725
        %727 = vdwg.mxu0
        %v728 = vadd.f32 %v335, %v610
        %v729 = vadd.f32 %v336, %v612
        %v730 = vadd.f32 %v337, %v614
        %v731 = vadd.f32 %v338, %v616
        %v732 = vadd.f32 %v339, %v620
        %v733 = vadd.f32 %v340, %v622
        %v734 = vadd.f32 %v341, %v624
        %v735 = vadd.f32 %v342, %v626
        %v736 = vadd.f32 %v343, %v630
        %v737 = vadd.f32 %v344, %v632
        %v738 = vadd.f32 %v345, %v634
        %v739 = vadd.f32 %v346, %v636
        %v740 = vadd.f32 %v347, %v640
        %v741 = vadd.f32 %v348, %v642
        %v742 = vadd.f32 %v349, %v644
        %v743 = vadd.f32 %v350, %v646
        %v744 = vadd.f32 %v351, %v650
        %v745 = vadd.f32 %v352, %v652
        %v746 = vadd.f32 %v353, %v654
        %v747 = vadd.f32 %v354, %v656
        %v748 = vadd.f32 %v355, %v660
        %v749 = vadd.f32 %v356, %v662
        %v750 = vadd.f32 %v357, %v664
        %v751 = vadd.f32 %v358, %v666
        %v752 = vadd.f32 %v359, %v670
        %v753 = vadd.f32 %v360, %v672
        %v754 = vadd.f32 %v361, %v674
        %v755 = vadd.f32 %v362, %v676
        %v756 = vadd.f32 %v363, %v680
        %v757 = vadd.f32 %v364, %v682
        %v758 = vadd.f32 %v365, %v684
        %v759 = vadd.f32 %v366, %v686
        %v760 = vadd.f32 %v367, %v690
        %v761 = vadd.f32 %v368, %v692
        %v762 = vadd.f32 %v369, %v694
        %v763 = vadd.f32 %v370, %v696
        %v764 = vadd.f32 %v371, %v700
        %v765 = vadd.f32 %v372, %v702
        %v766 = vadd.f32 %v373, %v704
        %v767 = vadd.f32 %v374, %v706
        %v768 = vadd.f32 %v375, %v710
        %v769 = vadd.f32 %v376, %v712
        %v770 = vadd.f32 %v377, %v714
        %v771 = vadd.f32 %v378, %v716
        %v772 = vadd.f32 %v379, %v720
        %v773 = vadd.f32 %v380, %v722
        %v774 = vadd.f32 %v381, %v724
        %v775 = vadd.f32 %v382, %v726
        %776 = vst [vmem:[#allocation2] sm:$0xff] %v728
        %777 = vst [vmem:[#allocation2 + $0x8] sm:$0xff] %v729
        %778 = vst [vmem:[#allocation2 + $0x10] sm:$0xff] %v730
        %779 = vst [vmem:[#allocation2 + $0x18] sm:$0xff] %v731
        %780 = vst [vmem:[#allocation2 + $0x20] sm:$0xff] %v732
        %781 = vst [vmem:[#allocation2 + $0x28] sm:$0xff] %v733
        %782 = vst [vmem:[#allocation2 + $0x30] sm:$0xff] %v734
        %783 = vst [vmem:[#allocation2 + $0x38] sm:$0xff] %v735
        %784 = vst [vmem:[#allocation2 + $0x40] sm:$0xff] %v736
        %785 = vst [vmem:[#allocation2 + $0x48] sm:$0xff] %v737
        %786 = vst [vmem:[#allocation2 + $0x50] sm:$0xff] %v738
        %787 = vst [vmem:[#allocation2 + $0x58] sm:$0xff] %v739
        %788 = vst [vmem:[#allocation2 + $0x60] sm:$0xff] %v740
        %789 = vst [vmem:[#allocation2 + $0x68] sm:$0xff] %v741
        %790 = vst [vmem:[#allocation2 + $0x70] sm:$0xff] %v742
        %791 = vst [vmem:[#allocation2 + $0x78] sm:$0xff] %v743
        %792 = vst [vmem:[#allocation2 + $0x80] sm:$0xff] %v744
        %793 = vst [vmem:[#allocation2 + $0x88] sm:$0xff] %v745
        %794 = vst [vmem:[#allocation2 + $0x90] sm:$0xff] %v746
        %795 = vst [vmem:[#allocation2 + $0x98] sm:$0xff] %v747
        %796 = vst [vmem:[#allocation2 + $0xa0] sm:$0xff] %v748
        %797 = vst [vmem:[#allocation2 + $0xa8] sm:$0xff] %v749
        %798 = vst [vmem:[#allocation2 + $0xb0] sm:$0xff] %v750
        %799 = vst [vmem:[#allocation2 + $0xb8] sm:$0xff] %v751
        %800 = vst [vmem:[#allocation2 + $0xc0] sm:$0xff] %v752
        %801 = vst [vmem:[#allocation2 + $0xc8] sm:$0xff] %v753
        %802 = vst [vmem:[#allocation2 + $0xd0] sm:$0xff] %v754
        %803 = vst [vmem:[#allocation2 + $0xd8] sm:$0xff] %v755
        %804 = vst [vmem:[#allocation2 + $0xe0] sm:$0xff] %v756
        %805 = vst [vmem:[#allocation2 + $0xe8] sm:$0xff] %v757
        %806 = vst [vmem:[#allocation2 + $0xf0] sm:$0xff] %v758
        %807 = vst [vmem:[#allocation2 + $0xf8] sm:$0xff] %v759
        %808 = vst [vmem:[#allocation2 + $0x100] sm:$0xff] %v760
        %809 = vst [vmem:[#allocation2 + $0x108] sm:$0xff] %v761
        %810 = vst [vmem:[#allocation2 + $0x110] sm:$0xff] %v762
        %811 = vst [vmem:[#allocation2 + $0x118] sm:$0xff] %v763
        %812 = vst [vmem:[#allocation2 + $0x120] sm:$0xff] %v764
        %813 = vst [vmem:[#allocation2 + $0x128] sm:$0xff] %v765
        %814 = vst [vmem:[#allocation2 + $0x130] sm:$0xff] %v766
        %815 = vst [vmem:[#allocation2 + $0x138] sm:$0xff] %v767
        %816 = vst [vmem:[#allocation2 + $0x140] sm:$0xff] %v768
        %817 = vst [vmem:[#allocation2 + $0x148] sm:$0xff] %v769
        %818 = vst [vmem:[#allocation2 + $0x150] sm:$0xff] %v770
        %819 = vst [vmem:[#allocation2 + $0x158] sm:$0xff] %v771
        %820 = vst [vmem:[#allocation2 + $0x160] sm:$0xff] %v772
        %821 = vst [vmem:[#allocation2 + $0x168] sm:$0xff] %v773
        %822 = vst [vmem:[#allocation2 + $0x170] sm:$0xff] %v774
        %823 = vst [vmem:[#allocation2 + $0x178] sm:$0xff] %v775
        // Predicated region
        $region49: #{tpu_custom_call.1} parent=31 // pred_check
          %p824 = pneg %p283
        $region50: #{tpu_custom_call.1} parent=31 // pred_check_branch
          %826 = sbr.rel (%p824) target = $region52
        $region51: #{tpu_custom_call.1} parent=31 // pred_region
          %v827 = vld [vmem:[#allocation2] sm:$0xff]
          %v828 = vld [vmem:[#allocation2 + $0x8] sm:$0xff]
          %v829 = vld [vmem:[#allocation2 + $0x10] sm:$0xff]
          %v830 = vld [vmem:[#allocation2 + $0x18] sm:$0xff]
          %v831 = vld [vmem:[#allocation2 + $0x20] sm:$0xff]
          %v832 = vld [vmem:[#allocation2 + $0x28] sm:$0xff]
          %v833 = vld [vmem:[#allocation2 + $0x30] sm:$0xff]
          %v834 = vld [vmem:[#allocation2 + $0x38] sm:$0xff]
          %v835 = vld [vmem:[#allocation2 + $0x40] sm:$0xff]
          %v836 = vld [vmem:[#allocation2 + $0x48] sm:$0xff]
          %v837 = vld [vmem:[#allocation2 + $0x50] sm:$0xff]
          %v838 = vld [vmem:[#allocation2 + $0x58] sm:$0xff]
          %v839 = vld [vmem:[#allocation2 + $0x60] sm:$0xff]
          %v840 = vld [vmem:[#allocation2 + $0x68] sm:$0xff]
          %v841 = vld [vmem:[#allocation2 + $0x70] sm:$0xff]
          %v842 = vld [vmem:[#allocation2 + $0x78] sm:$0xff]
          %v843 = vld [vmem:[#allocation2 + $0x80] sm:$0xff]
          %v844 = vld [vmem:[#allocation2 + $0x88] sm:$0xff]
          %v845 = vld [vmem:[#allocation2 + $0x90] sm:$0xff]
          %v846 = vld [vmem:[#allocation2 + $0x98] sm:$0xff]
          %v847 = vld [vmem:[#allocation2 + $0xa0] sm:$0xff]
          %v848 = vld [vmem:[#allocation2 + $0xa8] sm:$0xff]
          %v849 = vld [vmem:[#allocation2 + $0xb0] sm:$0xff]
          %v850 = vld [vmem:[#allocation2 + $0xb8] sm:$0xff]
          %v851 = vld [vmem:[#allocation2 + $0xc0] sm:$0xff]
          %v852 = vld [vmem:[#allocation2 + $0xc8] sm:$0xff]
          %v853 = vld [vmem:[#allocation2 + $0xd0] sm:$0xff]
          %v854 = vld [vmem:[#allocation2 + $0xd8] sm:$0xff]
          %v855 = vld [vmem:[#allocation2 + $0xe0] sm:$0xff]
          %v856 = vld [vmem:[#allocation2 + $0xe8] sm:$0xff]
          %v857 = vld [vmem:[#allocation2 + $0xf0] sm:$0xff]
          %v858 = vld [vmem:[#allocation2 + $0xf8] sm:$0xff]
          %v859 = vld [vmem:[#allocation2 + $0x100] sm:$0xff]
          %v860 = vld [vmem:[#allocation2 + $0x108] sm:$0xff]
          %v861 = vld [vmem:[#allocation2 + $0x110] sm:$0xff]
          %v862 = vld [vmem:[#allocation2 + $0x118] sm:$0xff]
          %v863 = vld [vmem:[#allocation2 + $0x120] sm:$0xff]
          %v864 = vld [vmem:[#allocation2 + $0x128] sm:$0xff]
          %v865 = vld [vmem:[#allocation2 + $0x130] sm:$0xff]
          %v866 = vld [vmem:[#allocation2 + $0x138] sm:$0xff]
          %v867 = vld [vmem:[#allocation2 + $0x140] sm:$0xff]
          %v868 = vld [vmem:[#allocation2 + $0x148] sm:$0xff]
          %v869 = vld [vmem:[#allocation2 + $0x150] sm:$0xff]
          %v870 = vld [vmem:[#allocation2 + $0x158] sm:$0xff]
          %v871 = vld [vmem:[#allocation2 + $0x160] sm:$0xff]
          %v872 = vld [vmem:[#allocation2 + $0x168] sm:$0xff]
          %v873 = vld [vmem:[#allocation2 + $0x170] sm:$0xff]
          %v874 = vld [vmem:[#allocation2 + $0x178] sm:$0xff]
          %v875 = vld [vmem:[%s248] sm:$0x3]
          %v877 = vlaneseq
          %v878 = vshrl.u32 %v877, 7
          %v879 = vsub.s32 0, %v878
          %v880 = vrot.slane %v875, %v879
          %v881 = vlaneseq
          %v882 = vshrl.u32 %v881, 7
          %v883 = vsub.s32 1, %v882
          %v884 = vrot.slane %v875, %v883
          %v887 = vadd.f32 %v827, %v880
          %v888 = vadd.f32 %v828, %v884
          %v889 = vadd.f32 %v829, %v880
          %v890 = vadd.f32 %v830, %v884
          %v891 = vadd.f32 %v831, %v880
          %v892 = vadd.f32 %v832, %v884
          %v893 = vadd.f32 %v833, %v880
          %v894 = vadd.f32 %v834, %v884
          %v895 = vadd.f32 %v835, %v880
          %v896 = vadd.f32 %v836, %v884
          %v897 = vadd.f32 %v837, %v880
          %v898 = vadd.f32 %v838, %v884
          %v899 = vadd.f32 %v839, %v880
          %v900 = vadd.f32 %v840, %v884
          %v901 = vadd.f32 %v841, %v880
          %v902 = vadd.f32 %v842, %v884
          %v903 = vadd.f32 %v843, %v880
          %v904 = vadd.f32 %v844, %v884
          %v905 = vadd.f32 %v845, %v880
          %v906 = vadd.f32 %v846, %v884
          %v907 = vadd.f32 %v847, %v880
          %v908 = vadd.f32 %v848, %v884
          %v909 = vadd.f32 %v849, %v880
          %v910 = vadd.f32 %v850, %v884
          %v911 = vadd.f32 %v851, %v880
          %v912 = vadd.f32 %v852, %v884
          %v913 = vadd.f32 %v853, %v880
          %v914 = vadd.f32 %v854, %v884
          %v915 = vadd.f32 %v855, %v880
          %v916 = vadd.f32 %v856, %v884
          %v917 = vadd.f32 %v857, %v880
          %v918 = vadd.f32 %v858, %v884
          %v919 = vadd.f32 %v859, %v880
          %v920 = vadd.f32 %v860, %v884
          %v921 = vadd.f32 %v861, %v880
          %v922 = vadd.f32 %v862, %v884
          %v923 = vadd.f32 %v863, %v880
          %v924 = vadd.f32 %v864, %v884
          %v925 = vadd.f32 %v865, %v880
          %v926 = vadd.f32 %v866, %v884
          %v927 = vadd.f32 %v867, %v880
          %v928 = vadd.f32 %v868, %v884
          %v929 = vadd.f32 %v869, %v880
          %v930 = vadd.f32 %v870, %v884
          %v931 = vadd.f32 %v871, %v880
          %v932 = vadd.f32 %v872, %v884
          %v933 = vadd.f32 %v873, %v880
          %v934 = vadd.f32 %v874, %v884
          %v935 = vpack.c.bf16 %v889, %v887
          %v936 = vpack.c.bf16 %v890, %v888
          %v937 = vpack.c.bf16 %v893, %v891
          %v938 = vpack.c.bf16 %v894, %v892
          %v939 = vpack.c.bf16 %v897, %v895
          %v940 = vpack.c.bf16 %v898, %v896
          %v941 = vpack.c.bf16 %v901, %v899
          %v942 = vpack.c.bf16 %v902, %v900
          %v943 = vpack.c.bf16 %v905, %v903
          %v944 = vpack.c.bf16 %v906, %v904
          %v945 = vpack.c.bf16 %v909, %v907
          %v946 = vpack.c.bf16 %v910, %v908
          %v947 = vpack.c.bf16 %v913, %v911
          %v948 = vpack.c.bf16 %v914, %v912
          %v949 = vpack.c.bf16 %v917, %v915
          %v950 = vpack.c.bf16 %v918, %v916
          %v951 = vpack.c.bf16 %v921, %v919
          %v952 = vpack.c.bf16 %v922, %v920
          %v953 = vpack.c.bf16 %v925, %v923
          %v954 = vpack.c.bf16 %v926, %v924
          %v955 = vpack.c.bf16 %v929, %v927
          %v956 = vpack.c.bf16 %v930, %v928
          %v957 = vpack.c.bf16 %v933, %v931
          %v958 = vpack.c.bf16 %v934, %v932
          %v983 = vunpack.c.l.b16 %v935
          %v984 = vunpack.c.l.b16 %v936
          %v985 = vunpack.c.h.b16 %v935
          %v986 = vunpack.c.h.b16 %v936
          %v987 = vunpack.c.l.b16 %v937
          %v988 = vunpack.c.l.b16 %v938
          %v989 = vunpack.c.h.b16 %v937
          %v990 = vunpack.c.h.b16 %v938
          %v991 = vunpack.c.l.b16 %v939
          %v992 = vunpack.c.l.b16 %v940
          %v993 = vunpack.c.h.b16 %v939
          %v994 = vunpack.c.h.b16 %v940
          %v995 = vunpack.c.l.b16 %v941
          %v996 = vunpack.c.l.b16 %v942
          %v997 = vunpack.c.h.b16 %v941
          %v998 = vunpack.c.h.b16 %v942
          %v999 = vunpack.c.l.b16 %v943
          %v1000 = vunpack.c.l.b16 %v944
          %v1001 = vunpack.c.h.b16 %v943
          %v1002 = vunpack.c.h.b16 %v944
          %v1003 = vunpack.c.l.b16 %v945
          %v1004 = vunpack.c.l.b16 %v946
          %v1005 = vunpack.c.h.b16 %v945
          %v1006 = vunpack.c.h.b16 %v946
          %v1007 = vunpack.c.l.b16 %v947
          %v1008 = vunpack.c.l.b16 %v948
          %v1009 = vunpack.c.h.b16 %v947
          %v1010 = vunpack.c.h.b16 %v948
          %v1011 = vunpack.c.l.b16 %v949
          %v1012 = vunpack.c.l.b16 %v950
          %v1013 = vunpack.c.h.b16 %v949
          %v1014 = vunpack.c.h.b16 %v950
          %v1015 = vunpack.c.l.b16 %v951
          %v1016 = vunpack.c.l.b16 %v952
          %v1017 = vunpack.c.h.b16 %v951
          %v1018 = vunpack.c.h.b16 %v952
          %v1019 = vunpack.c.l.b16 %v953
          %v1020 = vunpack.c.l.b16 %v954
          %v1021 = vunpack.c.h.b16 %v953
          %v1022 = vunpack.c.h.b16 %v954
          %v1023 = vunpack.c.l.b16 %v955
          %v1024 = vunpack.c.l.b16 %v956
          %v1025 = vunpack.c.h.b16 %v955
          %v1026 = vunpack.c.h.b16 %v956
          %v1027 = vunpack.c.l.b16 %v957
          %v1028 = vunpack.c.l.b16 %v958
          %v1029 = vunpack.c.h.b16 %v957
          %v1030 = vunpack.c.h.b16 %v958
          %v1031 = vpack.c.b16 %v984, %v983
          %v1032 = vpack.c.b16 %v986, %v985
          %v1033 = vpack.c.b16 %v988, %v987
          %v1034 = vpack.c.b16 %v990, %v989
          %v1035 = vpack.c.b16 %v992, %v991
          %v1036 = vpack.c.b16 %v994, %v993
          %v1037 = vpack.c.b16 %v996, %v995
          %v1038 = vpack.c.b16 %v998, %v997
          %v1039 = vpack.c.b16 %v1000, %v999
          %v1040 = vpack.c.b16 %v1002, %v1001
          %v1041 = vpack.c.b16 %v1004, %v1003
          %v1042 = vpack.c.b16 %v1006, %v1005
          %v1043 = vpack.c.b16 %v1008, %v1007
          %v1044 = vpack.c.b16 %v1010, %v1009
          %v1045 = vpack.c.b16 %v1012, %v1011
          %v1046 = vpack.c.b16 %v1014, %v1013
          %v1047 = vpack.c.b16 %v1016, %v1015
          %v1048 = vpack.c.b16 %v1018, %v1017
          %v1049 = vpack.c.b16 %v1020, %v1019
          %v1050 = vpack.c.b16 %v1022, %v1021
          %v1051 = vpack.c.b16 %v1024, %v1023
          %v1052 = vpack.c.b16 %v1026, %v1025
          %v1053 = vpack.c.b16 %v1028, %v1027
          %v1054 = vpack.c.b16 %v1030, %v1029
          %1079 = vst [vmem:[%s275] sm:$0xff] %v1031
          %1080 = vst [vmem:[%s275 + $0x8] sm:$0xff] %v1032
          %1081 = vst [vmem:[%s275 + $0x10] sm:$0xff] %v1033
          %1082 = vst [vmem:[%s275 + $0x18] sm:$0xff] %v1034
          %1083 = vst [vmem:[%s275 + $0x20] sm:$0xff] %v1035
          %1084 = vst [vmem:[%s275 + $0x28] sm:$0xff] %v1036
          %1085 = vst [vmem:[%s275 + $0x30] sm:$0xff] %v1037
          %1086 = vst [vmem:[%s275 + $0x38] sm:$0xff] %v1038
          %1087 = vst [vmem:[%s275 + $0x40] sm:$0xff] %v1039
          %1088 = vst [vmem:[%s275 + $0x48] sm:$0xff] %v1040
          %1089 = vst [vmem:[%s275 + $0x50] sm:$0xff] %v1041
          %1090 = vst [vmem:[%s275 + $0x58] sm:$0xff] %v1042
          %1091 = vst [vmem:[%s275 + $0x60] sm:$0xff] %v1043
          %1092 = vst [vmem:[%s275 + $0x68] sm:$0xff] %v1044
          %1093 = vst [vmem:[%s275 + $0x70] sm:$0xff] %v1045
          %1094 = vst [vmem:[%s275 + $0x78] sm:$0xff] %v1046
          %1095 = vst [vmem:[%s275 + $0x80] sm:$0xff] %v1047
          %1096 = vst [vmem:[%s275 + $0x88] sm:$0xff] %v1048
          %1097 = vst [vmem:[%s275 + $0x90] sm:$0xff] %v1049
          %1098 = vst [vmem:[%s275 + $0x98] sm:$0xff] %v1050
          %1099 = vst [vmem:[%s275 + $0xa0] sm:$0xff] %v1051
          %1100 = vst [vmem:[%s275 + $0xa8] sm:$0xff] %v1052
          %1101 = vst [vmem:[%s275 + $0xb0] sm:$0xff] %v1053
          %1102 = vst [vmem:[%s275 + $0xb8] sm:$0xff] %v1054
        $region52: #{tpu_custom_call.1} parent=31 // pred_fallthru
          _
        %s1103 = sand.u32 %s132, 1
        %s1104 = scalar_lea.sflag [#allocation5], %s1103
        %s1105 = sand.u32 %s132, 1
        %s1106 = smul.addr %s1105, 192
        %s1107 = scalar_lea.vmem [#allocation9], %s1106
        // Predicated region
        $region53: #{tpu_custom_call.1} parent=31 // pred_check
          %p1108 = pneg %p142
        $region54: #{tpu_custom_call.1} parent=31 // pred_check_branch
          %1110 = sbr.rel (%p1108) target = $region56
        $region55: #{tpu_custom_call.1} parent=31 // pred_region
          %s1111 = smul.u32 24, %s26
          %s1112 = smul.u32 2, %s27
          %s1114 = ssub.s32 3072, 3072
          %1115 = vsyncadd %s1104, %s1114
          %s1116 = smul.addr %s1111, 8
          %s1117 = sadd.s32 %s1112, %s1116
          %s1118 = smul.addr %s1117, 64
          %s1119 = scalar_lea.hbm %s3, %s1118
          %s1120 = sshll.u32 %s1107, 4
          %s1121 = int_to_ptr.vmem [resolvable:$true] %s1120
          %1126 = dma.vmem_to_hbm [thread:$0]  %s1121, 3072, %s1119, %s1104, 128, 512, 8
        $region56: #{tpu_custom_call.1} parent=31 // pred_fallthru
          _
      $region32: #{tpu_custom_call.1} parent=5 // pred_fallthru
        _
      %p1127 = scmp.le.s32.totalorder 2, %s16
      // Predicated region
      $region57: #{tpu_custom_call.1} parent=5 // pred_check
        %p1128 = pneg %p1127
      $region58: #{tpu_custom_call.1} parent=5 // pred_check_branch
        %1130 = sbr.rel (%p1128) target = $region60
      $region59: #{tpu_custom_call.1} parent=5 // pred_region
        %s1131 = ssub.s32 %s16, 2
        // Predicated region
        $region61: #{tpu_custom_call.1} parent=59 // pred_check
          %p1132 = pneg %p148
        $region62: #{tpu_custom_call.1} parent=59 // pred_check_branch
          %1134 = sbr.rel (%p1132) target = $region64
        $region63: #{tpu_custom_call.1} parent=59 // pred_region
          %s1135 = sand.u32 %s133, 1
          %s1136 = scalar_lea.sflag [#allocation5], %s1135
          %s1137 = sand.u32 %s133, 1
          %s1138 = smul.addr %s1137, 192
          %s1139 = scalar_lea.vmem [#allocation9], %s1138
          %1140 = dma.done %s1136, 3072
        $region64: #{tpu_custom_call.1} parent=59 // pred_fallthru
          _
      $region60: #{tpu_custom_call.1} parent=5 // pred_fallthru
        _
    $region6: #{tpu_custom_call.1} parent=1 // loop_footer
      %s20 = sadd.s32 1, %s16
    $region7: #{tpu_custom_call.1} parent=1 // loop_footer_branch
      %15 = sbr.rel target = $region3
    $region8: #{tpu_custom_call.1} parent=1 // loop_exit
      _
    %1141 = vsyncpa [#allocation4], 1
    %s1142 = scalar_lea.sflag [#allocation4], 1
    %1143 = vsyncpa %s1142, 1
    %1144 = vsyncpa [#allocation7], 1
    %s1145 = scalar_lea.sflag [#allocation7], 1
    %1146 = vsyncpa %s1145, 1
    %1147 = vsyncpa [#allocation5], 1
    %s1148 = scalar_lea.sflag [#allocation5], 1
    %1149 = vsyncpa %s1148, 1

</llo_original>
